<compile_context>
chip_gen: v7x
topology: tpu7x:2x2x1
jax: 0.10.0
libtpu: 0.0.40
codegen_flags: <defaults>
</compile_context>

<pallas_src>
import functools

import numpy as np

import jax
import jax.numpy as jnp
from jax.experimental import pallas as pl
from jax.experimental.pallas import tpu as pltpu


def trace_emb_kernel(n_ref, x_ref, w1_ref, w2_ref, wl_ref, bn_ref, bl_ref,
                     o_ref, *, c, l1, l2, eps):
    # n_ref : (1,)           i32  SMEM -- number of valid traces (lanes)
    # x_ref : (L0*IC, Npad)  f32       -- position-major input, batch on lanes
    # w1_ref: (L1*C, L0*IC)  f32       -- conv1 block-Toeplitz weight
    # w2_ref: (L2*C, L1*C)   f32       -- conv2 block-Toeplitz weight
    # wl_ref: (OC, L2*C)     f32       -- linear weight, columns position-major
    # bn_ref: (4, C, 1)      f32       -- [gamma1, beta1, gamma2, beta2]
    # bl_ref: (OC, 1)        f32       -- linear bias
    # o_ref : (OC, Npad)     f32       -- lane-dense output slab
    npad = x_ref.shape[-1]
    n_valid = n_ref[0]
    nf = n_valid.astype(jnp.float32)
    lane = jax.lax.broadcasted_iota(jnp.int32, (1, 1, npad), 2)
    lane_ok = lane < n_valid                                   # (1, 1, Npad)

    def bn_relu(y, gamma, beta, l_out, mask_output):
        # y: (l_out*C, Npad). Train-mode BatchNorm1d over (batch, positions).
        y3 = y.reshape(l_out, c, npad)
        inv_cnt = 1.0 / (nf * l_out)
        # Position fold on the VPU, then ONE cross-lane (XLU) reduction.
        # Padded lanes of y are exactly zero (zero-padded x, no conv bias),
        # so the unmasked lane sum is exact.
        mu = y3.sum(axis=0).sum(axis=1, keepdims=True) * inv_cnt       # (C,1)
        # Two-pass variance: center, zero padded lanes, square, reduce.
        d = jnp.where(lane_ok, y3 - mu[None], 0.0)             # (l_out,C,Npad)
        var = (d * d).sum(axis=0).sum(axis=1, keepdims=True) * inv_cnt  # (C,1)
        gs = gamma * jax.lax.rsqrt(var + eps)                  # (C,1)
        a = jnp.maximum(d * gs[None] + beta[None], 0.0)
        if mask_output:
            # Needed only when the result feeds another layer's batch stats:
            # padded lanes would otherwise carry relu(beta) != 0.
            a = jnp.where(lane_ok, a, 0.0)
        return a.reshape(l_out * c, npad)

    # Three matmuls total; f32 operands, f32 accumulation.
    y1 = jnp.dot(w1_ref[...], x_ref[...], preferred_element_type=jnp.float32)
    a1 = bn_relu(y1, bn_ref[0], bn_ref[1], l1, mask_output=True)
    y2 = jnp.dot(w2_ref[...], a1, preferred_element_type=jnp.float32)
    a2 = bn_relu(y2, bn_ref[2], bn_ref[3], l2, mask_output=False)
    out = jnp.dot(wl_ref[...], a2, preferred_element_type=jnp.float32)
    o_ref[...] = out + bl_ref[...]                             # lane-dense store


def pack_params(w1, w2, w_lin, b_lin, gamma1, beta1, gamma2, beta2):
    """One-time parameter reformat (host-side): block-Toeplitz conv weights,
    position-major linear columns, stacked BN params."""
    w1 = np.asarray(w1, np.float32)
    w2 = np.asarray(w2, np.float32)
    w_lin = np.asarray(w_lin, np.float32)
    c, ic, k = w1.shape
    oc, in_feat = w_lin.shape
    l2 = in_feat // c
    assert in_feat == c * l2, "Linear in_features must equal C*(L-2)"
    l1 = l2 + (k - 1)
    l0 = l1 + (k - 1)

    # Conv1: y[l*C+co, :] = sum_{kk,ci} w1[co,ci,kk] * x[(l+kk)*IC+ci, :]
    w1t = np.zeros((l1 * c, l0 * ic), np.float32)
    for l in range(l1):
        for kk in range(k):
            w1t[l * c:(l + 1) * c, (l + kk) * ic:(l + kk + 1) * ic] = w1[:, :, kk]
    # Conv2: same structure over the (L1*C, Npad) activations.
    w2t = np.zeros((l2 * c, l1 * c), np.float32)
    for l in range(l2):
        for kk in range(k):
            w2t[l * c:(l + 1) * c, (l + kk) * c:(l + kk + 1) * c] = w2[:, :, kk]
    # Linear: PyTorch flattens (N, C, L2) channel-major (col = ci*L2 + p); our
    # activation rows are position-major (row = p*C + ci) -> permute columns.
    wl = w_lin.reshape(oc, c, l2).transpose(0, 2, 1).reshape(oc, l2 * c)

    bn = np.stack([np.asarray(gamma1), np.asarray(beta1),
                   np.asarray(gamma2), np.asarray(beta2)]).astype(np.float32)[:, :, None]
    bl = np.asarray(b_lin, np.float32).reshape(oc, 1)

    packed = (jnp.asarray(w1t), jnp.asarray(w2t), jnp.asarray(wl),
              jnp.asarray(bn), jnp.asarray(bl))
    meta = dict(c=c, ic=ic, l0=l0, l1=l1, l2=l2, oc=oc)
    return packed, meta


def make_trace_emb_forward(packed, meta):
    w1t, w2t, wl, bn, bl = packed
    c, ic, l0, l1, l2, oc = (meta[k] for k in ("c", "ic", "l0", "l1", "l2", "oc"))
    kernel = functools.partial(trace_emb_kernel, c=c, l1=l1, l2=l2, eps=1e-5)

    @jax.jit
    def forward(x):
        n = x.shape[0]
        assert x.shape == (n, ic, l0)
        npad = max(128, ((n + 127) // 128) * 128)   # lane-dense batch axis

        # Layout plumbing only: flat position-major slab, batch on lanes.
        x_flat = jnp.transpose(x.astype(jnp.float32), (2, 1, 0)).reshape(l0 * ic, n)
        x_pad = jnp.pad(x_flat, ((0, 0), (0, npad - n)))
        n_arr = jnp.full((1,), n, dtype=jnp.int32)

        vmem = pl.BlockSpec(memory_space=pltpu.MemorySpace.VMEM)
        smem = pl.BlockSpec(memory_space=pltpu.MemorySpace.SMEM)
        out = pl.pallas_call(
            kernel,
            out_shape=jax.ShapeDtypeStruct((oc, npad), jnp.float32),
            in_specs=[smem] + [vmem] * 6,
            out_specs=vmem,
            compiler_params=pltpu.CompilerParams(
                # Let XLA fuse the x transpose/pad into the call (avoids a
                # separate HBM write+read of the dominant input).
                allow_input_fusion=[False, True, False, False, False, False, False],
            ),
        )(n_arr, x_pad, w1t, w2t, wl, bn, bl)
        return out[:, :n].T                                    # (N, OC)

    return forward


def _reference(x, w1, w2, w_lin, b_lin, g1, b1, g2, b2, eps=1e-5):
    """Pure-JAX f32 reference matching PyTorch train-mode forward semantics."""
    def block(x, w, g, b):
        y = jax.lax.conv_general_dilated(
            x, w, window_strides=(1,), padding=[(0, 0)],
            dimension_numbers=("NCH", "OIH", "NCH"))
        mu = y.mean(axis=(0, 2), keepdims=True)
        var = ((y - mu) ** 2).mean(axis=(0, 2), keepdims=True)
        y = (y - mu) * jax.lax.rsqrt(var + eps)
        y = y * g[None, :, None] + b[None, :, None]
        return jnp.maximum(y, 0.0)

    a = block(x, w1, g1, b1)
    a = block(a, w2, g2, b2)
    return a.reshape(a.shape[0], -1) @ w_lin.T + b_lin[None, :]


if __name__ == "__main__":
    # TraceEmbNet(input_channels=4, output_channels=8).
    # Linear(12*IC, OC) forces the input length L = 5 (so L-2 = 3 positions).
    IC, OC = 4, 8
    N, L = 2, 5
    C = 4 * IC

    key = jax.random.PRNGKey(0)
    ks = jax.random.split(key, 8)
    x = jax.random.normal(ks[0], (N, IC, L), dtype=jnp.float32)
    w1 = jax.random.normal(ks[1], (C, IC, 2), dtype=jnp.float32) * 0.3
    w2 = jax.random.normal(ks[2], (C, C, 2), dtype=jnp.float32) * 0.2
    w_lin = jax.random.normal(ks[3], (OC, 3 * C), dtype=jnp.float32) * 0.2
    b_lin = jax.random.normal(ks[4], (OC,), dtype=jnp.float32) * 0.1
    gamma1 = 1.0 + 0.1 * jax.random.normal(ks[5], (C,), dtype=jnp.float32)
    beta1 = 0.1 * jax.random.normal(ks[6], (C,), dtype=jnp.float32)
    gamma2 = jnp.ones((C,), dtype=jnp.float32)   # nn.BatchNorm1d default init
    beta2 = jnp.zeros((C,), dtype=jnp.float32)

    packed, meta = pack_params(w1, w2, w_lin, b_lin, gamma1, beta1, gamma2, beta2)
    forward = make_trace_emb_forward(packed, meta)

    out = forward(x)
    out = jax.block_until_ready(out)

    ref = _reference(x, w1, w2, w_lin, b_lin, gamma1, beta1, gamma2, beta2)
    assert out.shape == (N, OC)
    # All kernel matmuls are f32 now -> tolerance tightened vs the previous
    # bf16-operand version (3e-2 -> 5e-3).
    assert jnp.allclose(out, ref, atol=5e-3, rtol=5e-3), "mismatch vs JAX reference"

    print("KERNEL_OK")
</pallas_src>

<mosaic_0001>
module attributes {stable_mosaic.version = 11 : i64} {
  func.func @trace_emb_kernel(%arg0: memref<1xi32, #tpu.memory_space<smem>>, %arg1: memref<20x128xf32, #tpu.memory_space<vmem>>, %arg2: memref<64x20xf32, #tpu.memory_space<vmem>>, %arg3: memref<48x64xf32, #tpu.memory_space<vmem>>, %arg4: memref<8x48xf32, #tpu.memory_space<vmem>>, %arg5: memref<4x16x1xf32, #tpu.memory_space<vmem>>, %arg6: memref<8x1xf32, #tpu.memory_space<vmem>>, %arg7: memref<8x128xf32, #tpu.memory_space<vmem>>) attributes {dimension_semantics = [], scalar_prefetch = 0 : i64, scratch_operands = 0 : i64, tpu.core_type = #tpu.core_type<tc>} {
    %c0 = arith.constant 0 : index
    %0 = memref.load %arg0[%c0] : memref<1xi32, #tpu.memory_space<smem>>
    %1 = arith.sitofp %0 : i32 to f32
    %2 = tpu.iota {dimensions = array<i32: 2>} : vector<1x1x128xi32>
    %3 = vector.broadcast %0 : i32 to vector<1x1x128xi32>
    %4 = arith.cmpi slt, %2, %3 : vector<1x1x128xi32>
    %c0_0 = arith.constant 0 : index
    %c0_1 = arith.constant 0 : index
    %5 = vector.load %arg2[%c0_0, %c0_1] : memref<64x20xf32, #tpu.memory_space<vmem>>, vector<64x20xf32>
    %c0_2 = arith.constant 0 : index
    %c0_3 = arith.constant 0 : index
    %6 = vector.load %arg1[%c0_2, %c0_3] : memref<20x128xf32, #tpu.memory_space<vmem>>, vector<20x128xf32>
    %cst = arith.constant dense<0.000000e+00> : vector<64x128xf32>
    %7 = tpu.matmul %5, %6, %cst {dimension_numbers = #tpu.dot_dimension_numbers<[1], [0], [0], [1], [0, 0, 1, 1], [], []>} : vector<64x20xf32>, vector<20x128xf32>, vector<64x128xf32> -> vector<64x128xf32>
    %c0_4 = arith.constant 0 : index
    %c0_5 = arith.constant 0 : index
    %c0_6 = arith.constant 0 : index
    %8 = vector.load %arg5[%c0_4, %c0_5, %c0_6] : memref<4x16x1xf32, #tpu.memory_space<vmem>>, vector<1x16x1xf32>
    %9 = vector.shape_cast %8 : vector<1x16x1xf32> to vector<16x1xf32>
    %c1 = arith.constant 1 : index
    %c0_7 = arith.constant 0 : index
    %c0_8 = arith.constant 0 : index
    %10 = vector.load %arg5[%c1, %c0_7, %c0_8] : memref<4x16x1xf32, #tpu.memory_space<vmem>>, vector<1x16x1xf32>
    %11 = vector.shape_cast %10 : vector<1x16x1xf32> to vector<16x1xf32>
    %12 = vector.shape_cast %7 : vector<64x128xf32> to vector<4x16x128xf32>
    %cst_9 = arith.constant 4.000000e+00 : f32
    %13 = arith.mulf %1, %cst_9 : f32
    %cst_10 = arith.constant 1.000000e+00 : f32
    %14 = arith.divf %cst_10, %13 : f32
    %cst_11 = arith.constant dense<0.000000e+00> : vector<16x128xf32>
    %15 = vector.multi_reduction <add>, %12, %cst_11 [0] : vector<4x16x128xf32> to vector<16x128xf32>
    %cst_12 = arith.constant dense<0.000000e+00> : vector<16xf32>
    %16 = vector.multi_reduction <add>, %15, %cst_12 [1] : vector<16x128xf32> to vector<16xf32>
    %17 = vector.shape_cast %16 : vector<16xf32> to vector<16x1xf32>
    %18 = vector.broadcast %14 : f32 to vector<16x1xf32>
    %19 = arith.mulf %17, %18 : vector<16x1xf32>
    %20 = vector.shape_cast %19 : vector<16x1xf32> to vector<1x16x1xf32>
    %21 = vector.broadcast %20 : vector<1x16x1xf32> to vector<4x16x128xf32>
    %22 = arith.subf %12, %21 : vector<4x16x128xf32>
    %cst_13 = arith.constant 0.000000e+00 : f32
    %23 = vector.shape_cast %4 : vector<1x1x128xi1> to vector<1x1x128xi1>
    %24 = vector.broadcast %23 : vector<1x1x128xi1> to vector<4x16x128xi1>
    %25 = vector.broadcast %cst_13 : f32 to vector<4x16x128xf32>
    %26 = arith.select %24, %22, %25 : vector<4x16x128xi1>, vector<4x16x128xf32>
    %27 = arith.mulf %26, %26 : vector<4x16x128xf32>
    %cst_14 = arith.constant dense<0.000000e+00> : vector<16x128xf32>
    %28 = vector.multi_reduction <add>, %27, %cst_14 [0] : vector<4x16x128xf32> to vector<16x128xf32>
    %cst_15 = arith.constant dense<0.000000e+00> : vector<16xf32>
    %29 = vector.multi_reduction <add>, %28, %cst_15 [1] : vector<16x128xf32> to vector<16xf32>
    %30 = vector.shape_cast %29 : vector<16xf32> to vector<16x1xf32>
    %31 = vector.broadcast %14 : f32 to vector<16x1xf32>
    %32 = arith.mulf %30, %31 : vector<16x1xf32>
    %cst_16 = arith.constant 9.99999974E-6 : f32
    %33 = vector.broadcast %cst_16 : f32 to vector<16x1xf32>
    %34 = arith.addf %32, %33 : vector<16x1xf32>
    %35 = math.rsqrt %34 : vector<16x1xf32>
    %36 = arith.mulf %9, %35 : vector<16x1xf32>
    %37 = vector.shape_cast %36 : vector<16x1xf32> to vector<1x16x1xf32>
    %38 = vector.broadcast %37 : vector<1x16x1xf32> to vector<4x16x128xf32>
    %39 = arith.mulf %26, %38 : vector<4x16x128xf32>
    %40 = vector.shape_cast %11 : vector<16x1xf32> to vector<1x16x1xf32>
    %41 = vector.broadcast %40 : vector<1x16x1xf32> to vector<4x16x128xf32>
    %42 = arith.addf %39, %41 : vector<4x16x128xf32>
    %cst_17 = arith.constant 0.000000e+00 : f32
    %43 = vector.broadcast %cst_17 : f32 to vector<4x16x128xf32>
    %44 = arith.maximumf %42, %43 : vector<4x16x128xf32>
    %cst_18 = arith.constant 0.000000e+00 : f32
    %45 = vector.shape_cast %4 : vector<1x1x128xi1> to vector<1x1x128xi1>
    %46 = vector.broadcast %45 : vector<1x1x128xi1> to vector<4x16x128xi1>
    %47 = vector.broadcast %cst_18 : f32 to vector<4x16x128xf32>
    %48 = arith.select %46, %44, %47 : vector<4x16x128xi1>, vector<4x16x128xf32>
    %49 = vector.shape_cast %48 : vector<4x16x128xf32> to vector<64x128xf32>
    %c0_19 = arith.constant 0 : index
    %c0_20 = arith.constant 0 : index
    %50 = vector.load %arg3[%c0_19, %c0_20] : memref<48x64xf32, #tpu.memory_space<vmem>>, vector<48x64xf32>
    %cst_21 = arith.constant dense<0.000000e+00> : vector<48x128xf32>
    %51 = tpu.matmul %50, %49, %cst_21 {dimension_numbers = #tpu.dot_dimension_numbers<[1], [0], [0], [1], [0, 0, 1, 1], [], []>} : vector<48x64xf32>, vector<64x128xf32>, vector<48x128xf32> -> vector<48x128xf32>
    %c2 = arith.constant 2 : index
    %c0_22 = arith.constant 0 : index
    %c0_23 = arith.constant 0 : index
    %52 = vector.load %arg5[%c2, %c0_22, %c0_23] : memref<4x16x1xf32, #tpu.memory_space<vmem>>, vector<1x16x1xf32>
    %53 = vector.shape_cast %52 : vector<1x16x1xf32> to vector<16x1xf32>
    %c3 = arith.constant 3 : index
    %c0_24 = arith.constant 0 : index
    %c0_25 = arith.constant 0 : index
    %54 = vector.load %arg5[%c3, %c0_24, %c0_25] : memref<4x16x1xf32, #tpu.memory_space<vmem>>, vector<1x16x1xf32>
    %55 = vector.shape_cast %54 : vector<1x16x1xf32> to vector<16x1xf32>
    %56 = vector.shape_cast %51 : vector<48x128xf32> to vector<3x16x128xf32>
    %cst_26 = arith.constant 3.000000e+00 : f32
    %57 = arith.mulf %1, %cst_26 : f32
    %cst_27 = arith.constant 1.000000e+00 : f32
    %58 = arith.divf %cst_27, %57 : f32
    %cst_28 = arith.constant dense<0.000000e+00> : vector<16x128xf32>
    %59 = vector.multi_reduction <add>, %56, %cst_28 [0] : vector<3x16x128xf32> to vector<16x128xf32>
    %cst_29 = arith.constant dense<0.000000e+00> : vector<16xf32>
    %60 = vector.multi_reduction <add>, %59, %cst_29 [1] : vector<16x128xf32> to vector<16xf32>
    %61 = vector.shape_cast %60 : vector<16xf32> to vector<16x1xf32>
    %62 = vector.broadcast %58 : f32 to vector<16x1xf32>
    %63 = arith.mulf %61, %62 : vector<16x1xf32>
    %64 = vector.shape_cast %63 : vector<16x1xf32> to vector<1x16x1xf32>
    %65 = vector.broadcast %64 : vector<1x16x1xf32> to vector<3x16x128xf32>
    %66 = arith.subf %56, %65 : vector<3x16x128xf32>
    %cst_30 = arith.constant 0.000000e+00 : f32
    %67 = vector.shape_cast %4 : vector<1x1x128xi1> to vector<1x1x128xi1>
    %68 = vector.broadcast %67 : vector<1x1x128xi1> to vector<3x16x128xi1>
    %69 = vector.broadcast %cst_30 : f32 to vector<3x16x128xf32>
    %70 = arith.select %68, %66, %69 : vector<3x16x128xi1>, vector<3x16x128xf32>
    %71 = arith.mulf %70, %70 : vector<3x16x128xf32>
    %cst_31 = arith.constant dense<0.000000e+00> : vector<16x128xf32>
    %72 = vector.multi_reduction <add>, %71, %cst_31 [0] : vector<3x16x128xf32> to vector<16x128xf32>
    %cst_32 = arith.constant dense<0.000000e+00> : vector<16xf32>
    %73 = vector.multi_reduction <add>, %72, %cst_32 [1] : vector<16x128xf32> to vector<16xf32>
    %74 = vector.shape_cast %73 : vector<16xf32> to vector<16x1xf32>
    %75 = vector.broadcast %58 : f32 to vector<16x1xf32>
    %76 = arith.mulf %74, %75 : vector<16x1xf32>
    %cst_33 = arith.constant 9.99999974E-6 : f32
    %77 = vector.broadcast %cst_33 : f32 to vector<16x1xf32>
    %78 = arith.addf %76, %77 : vector<16x1xf32>
    %79 = math.rsqrt %78 : vector<16x1xf32>
    %80 = arith.mulf %53, %79 : vector<16x1xf32>
    %81 = vector.shape_cast %80 : vector<16x1xf32> to vector<1x16x1xf32>
    %82 = vector.broadcast %81 : vector<1x16x1xf32> to vector<3x16x128xf32>
    %83 = arith.mulf %70, %82 : vector<3x16x128xf32>
    %84 = vector.shape_cast %55 : vector<16x1xf32> to vector<1x16x1xf32>
    %85 = vector.broadcast %84 : vector<1x16x1xf32> to vector<3x16x128xf32>
    %86 = arith.addf %83, %85 : vector<3x16x128xf32>
    %cst_34 = arith.constant 0.000000e+00 : f32
    %87 = vector.broadcast %cst_34 : f32 to vector<3x16x128xf32>
    %88 = arith.maximumf %86, %87 : vector<3x16x128xf32>
    %89 = vector.shape_cast %88 : vector<3x16x128xf32> to vector<48x128xf32>
    %c0_35 = arith.constant 0 : index
    %c0_36 = arith.constant 0 : index
    %90 = vector.load %arg4[%c0_35, %c0_36] : memref<8x48xf32, #tpu.memory_space<vmem>>, vector<8x48xf32>
    %cst_37 = arith.constant dense<0.000000e+00> : vector<8x128xf32>
    %91 = tpu.matmul %90, %89, %cst_37 {dimension_numbers = #tpu.dot_dimension_numbers<[1], [0], [0], [1], [0, 0, 1, 1], [], []>} : vector<8x48xf32>, vector<48x128xf32>, vector<8x128xf32> -> vector<8x128xf32>
    %c0_38 = arith.constant 0 : index
    %c0_39 = arith.constant 0 : index
    %92 = vector.load %arg6[%c0_38, %c0_39] : memref<8x1xf32, #tpu.memory_space<vmem>>, vector<8x1xf32>
    %93 = vector.broadcast %92 : vector<8x1xf32> to vector<8x128xf32>
    %94 = arith.addf %91, %93 : vector<8x128xf32>
    %c0_40 = arith.constant 0 : index
    %c0_41 = arith.constant 0 : index
    %95 = vector.load %arg7[%c0_40, %c0_41] : memref<8x128xf32, #tpu.memory_space<vmem>>, vector<8x128xf32>
    tpu.vector_store %arg7[%c0_40, %c0_41], %94 {strides = array<i32>} : memref<8x128xf32, #tpu.memory_space<vmem>>, vector<8x128xf32>,
    return
  }
}

</mosaic_0001>

<llo_original>
// kernel: forward.2
$region0: #{forward.2}
  #allocation0 [shape = 'u32[]', space=smem, size = 0x4, offset = 0x4, fixed_abs, tag = 'smem constant byte address 0x4 - core index']
  #allocation1 [shape = 'u32[144,128]{1,0:T(1,128)}', space=vmem, size = 0x12000, scoped, tag = 'internal scratch']
  #allocation2 [shape = 's32[1]{0:T(128)S(6)}', space=smem, size = 0x200, scoped, tag = 'scoped memory for forward.2']
  #allocation3 [shape = 'u32[2048]{0}', space=vmem, size = 0x2000, scoped, tag = 'scoped memory for forward.2']
  #allocation4 [shape = 'u32[2048]{0}', space=vmem, size = 0x2000, scoped, tag = 'scoped memory for forward.2']
  #allocation5 [shape = 'u32[2048]{0}', space=vmem, size = 0x2000, scoped, tag = 'scoped memory for forward.2']
  #allocation6 [shape = 'u32[2048]{0}', space=vmem, size = 0x2000, scoped, tag = 'scoped memory for forward.2']
  #allocation7 [shape = 'u32[2048]{0}', space=vmem, size = 0x2000, scoped, tag = 'scoped memory for forward.2']
  %s0 = inlined_call_operand.<no memory space> [shape: s32[1], index: 0, kind: input, shape index: {}]
  %s1 = inlined_call_operand.hbm [shape: f32[64,20], index: 1, kind: input, shape index: {}]
  %s2 = inlined_call_operand.hbm [shape: f32[48,64], index: 2, kind: input, shape index: {}]
  %s3 = inlined_call_operand.vmem [shape: f32[8,48], index: 3, kind: input, shape index: {}]
  %s4 = inlined_call_operand.vmem [shape: f32[4,16,1], index: 4, kind: input, shape index: {}]
  %s5 = inlined_call_operand.vmem [shape: f32[8,1], index: 5, kind: input, shape index: {}]
  %s6 = inlined_call_operand.vmem [shape: f32[20,2], index: 6, kind: input, shape index: {}]
  %s7 = inlined_call_operand.<no memory space> [shape: f32[], index: 7, kind: input, shape index: {}]
  %s8 = inlined_call_operand.vmem [shape: f32[8,128], index: 8, kind: output, shape index: {}]
  %s9 = sld [smem:[#allocation0]]
  $region46: #{forward.2} parent=0
    _
  %s11 = ssub.s32 1, %s9
  %s12 = scalar_select 0, %s11, %s9
  %13 = sst [smem:[#allocation2]] %s0
  %v14 = vstv %s7
  $region1: #{forward.2} parent=0
    #allocation8 [shape = 'u8[32768]{0}', space=vmem, size = 0x8000, scoped, tag = 'input window, operand 2, single buffered']
    #allocation9 [shape = 's32[1]{0}', space=sflag, size = 0x4, scoped, tag = 'scoped memory for forward.2']
    #allocation10 [shape = 'u8[24576]{0}', space=vmem, size = 0x6000, scoped, tag = 'input window, operand 3, single buffered']
    #allocation11 [shape = 's32[1]{0}', space=sflag, size = 0x4, scoped, tag = 'scoped memory for forward.2']
    #allocation12 [shape = 'u8[12288]{0}', space=vmem, size = 0x3000, dematerialized = true, scoped, tag = 'FusionAdapter Buffer %fusion.1 = f32[20,128]{1,0:T(8,128)} fusion(%param_6.1, %param_7), kind=kLoop, calls=%fused_computation.1.clone, metadata={op_name="jit(forward)/jit(_pad)/pad" stack_frame_id=8}']
    %15 = vsyncpa [#allocation9], 0
    %16 = vsyncpa [#allocation11], 0
    // Predicated region
    $region2: #{forward.2} parent=1 // pred_check
      _
    $region3: #{forward.2} parent=1 // pred_check_branch
      %18 = sbr.rel (0) target = $region5
    $region4: #{forward.2} parent=1 // pred_region
      _
    $region5: #{forward.2} parent=1 // pred_fallthru
      _
    // Predicated region
    $region6: #{forward.2} parent=1 // pred_check
      _
    $region7: #{forward.2} parent=1 // pred_check_branch
      %20 = sbr.rel (0) target = $region9
    $region8: #{forward.2} parent=1 // pred_region
      _
    $region9: #{forward.2} parent=1 // pred_fallthru
      _
    // Predicated region
    $region10: #{forward.2} parent=1 // pred_check
      _
    $region11: #{forward.2} parent=1 // pred_check_branch
      %22 = sbr.rel (0) target = $region13
    $region12: #{forward.2} parent=1 // pred_region
      %s24 = ssub.s32 1024, 1024
      %25 = vsyncadd [#allocation9], %s24
      %s26 = sshll.u32 [#allocation8], 4
      %s27 = int_to_ptr.vmem [resolvable:$true] %s26
      %32 = dma.hbm_to_vmem [thread:$0]  %s1, 1024, %s27, [#allocation9], 128, 128, 8
    $region13: #{forward.2} parent=1 // pred_fallthru
      _
    // Predicated region
    $region14: #{forward.2} parent=1 // pred_check
      _
    $region15: #{forward.2} parent=1 // pred_check_branch
      %34 = sbr.rel (0) target = $region17
    $region16: #{forward.2} parent=1 // pred_region
      %s36 = ssub.s32 768, 768
      %37 = vsyncadd [#allocation11], %s36
      %s38 = sshll.u32 [#allocation10], 4
      %s39 = int_to_ptr.vmem [resolvable:$true] %s38
      %44 = dma.hbm_to_vmem [thread:$0]  %s2, 768, %s39, [#allocation11], 128, 128, 8
    $region17: #{forward.2} parent=1 // pred_fallthru
      _
    // Predicated region
    $region18: #{forward.2} parent=1 // pred_check
      _
    $region19: #{forward.2} parent=1 // pred_check_branch
      %46 = sbr.rel (0) target = $region21
    $region20: #{forward.2} parent=1 // pred_region
      _
    $region21: #{forward.2} parent=1 // pred_fallthru
      _
    // Predicated region
    $region22: #{forward.2} parent=1 // pred_check
      _
    $region23: #{forward.2} parent=1 // pred_check_branch
      %48 = sbr.rel (0) target = $region25
    $region24: #{forward.2} parent=1 // pred_region
      _
    $region25: #{forward.2} parent=1 // pred_fallthru
      _
    // Predicated region
    $region26: #{forward.2} parent=1 // pred_check
      _
    $region27: #{forward.2} parent=1 // pred_check_branch
      %50 = sbr.rel (0) target = $region29
    $region28: #{forward.2} parent=1 // pred_region
      _
    $region29: #{forward.2} parent=1 // pred_fallthru
      _
    // Predicated region
    $region30: #{forward.2} parent=1 // pred_check
      _
    $region31: #{forward.2} parent=1 // pred_check_branch
      %52 = sbr.rel (0) target = $region33
    $region32: #{forward.2} parent=1 // pred_region
      %53 = dma.done [#allocation9], 1024
    $region33: #{forward.2} parent=1 // pred_fallthru
      _
    // Predicated region
    $region34: #{forward.2} parent=1 // pred_check
      _
    $region35: #{forward.2} parent=1 // pred_check_branch
      %55 = sbr.rel (0) target = $region37
    $region36: #{forward.2} parent=1 // pred_region
      %56 = dma.done [#allocation11], 768
    $region37: #{forward.2} parent=1 // pred_fallthru
      _
    %v57 = vld [vmem:[%s6] sm:$0xff]
    %v58 = vlaneseq
    %v59 = vshrl.u32 %v58, 7
    %vm61 = vcmp.lt.s32.totalorder %v59, 20
    %v62 = vsel %vm61, %v57, %v14
    %v63 = vlaneseq
    %v64 = vand.u32 %v63, 127
    %vm66 = vcmp.lt.s32.totalorder %v64, 2
    %v67 = vsel %vm66, %v62, %v14
    %69 = vst [vmem:[#allocation12] sm:$0xff] %v67
    %s70 = scalar_lea.vmem %s6, 8
    %v71 = vld [vmem:[%s70] sm:$0xff]
    %v72 = vlaneseq
    %v73 = vshrl.u32 %v72, 7
    %v74 = vadd.s32 %v73, 8
    %vm75 = vcmp.lt.s32.totalorder %v74, 20
    %v76 = vsel %vm75, %v71, %v14
    %v77 = vlaneseq
    %v78 = vand.u32 %v77, 127
    %vm80 = vcmp.lt.s32.totalorder %v78, 2
    %v81 = vsel %vm80, %v76, %v14
    %s82 = scalar_lea.vmem [#allocation12], 8
    %84 = vst [vmem:[%s82] sm:$0xff] %v81
    %s85 = scalar_lea.vmem %s6, 16
    %v86 = vld [vmem:[%s85] sm:$0xff]
    %v87 = vlaneseq
    %v88 = vshrl.u32 %v87, 7
    %v89 = vadd.s32 %v88, 16
    %vm90 = vcmp.lt.s32.totalorder %v89, 20
    %v91 = vsel %vm90, %v86, %v14
    %v92 = vlaneseq
    %v93 = vand.u32 %v92, 127
    %vm95 = vcmp.lt.s32.totalorder %v93, 2
    %v96 = vsel %vm95, %v91, %v14
    %s97 = scalar_lea.vmem [#allocation12], 16
    %99 = vst [vmem:[%s97] sm:$0xff] %v96
    %s100 = sld [smem:[#allocation2]]
    %s101 = scvt.s32.f32 %s100
    %v102 = vlaneseq
    %v103 = vand.u32 %v102, 127
    %v104 = vstv %s100
    %vm105 = vcmp.lt.s32.totalorder %v103, %v104
    %v106 = vld [vmem:[#allocation8] sm:$0xff]
    %v107 = vld [vmem:[#allocation8 + $0x8] sm:$0xff]
    %v108 = vld [vmem:[#allocation8 + $0x10] sm:$0xff]
    %v109 = vld [vmem:[#allocation8 + $0x18] sm:$0xff]
    %v110 = vld [vmem:[#allocation8 + $0x20] sm:$0xff]
    %v111 = vld [vmem:[#allocation8 + $0x28] sm:$0xff]
    %v112 = vld [vmem:[#allocation8 + $0x30] sm:$0xff]
    %v113 = vld [vmem:[#allocation8 + $0x38] sm:$0xff]
    %v114 = vld [vmem:[#allocation12] sm:$0xff]
    %v115 = vld [vmem:[#allocation12 + $0x8] sm:$0xff]
    %v116 = vld [vmem:[#allocation12 + $0x10] sm:$0xf]
    %vm117 = vcmask 162816
    %v119 = vsel %vm117, %v106, 0
    %v122 = vsel %vm117, %v107, 0
    %v125 = vsel %vm117, %v108, 0
    %v128 = vsel %vm117, %v109, 0
    %v131 = vsel %vm117, %v110, 0
    %v134 = vsel %vm117, %v111, 0
    %v137 = vsel %vm117, %v112, 0
    %v140 = vsel %vm117, %v113, 0
    %vm142 = vcmask 1043456
    %v144 = vsel %vm142, %v116, 0
    %146 = vmatprep.subr.mxu0 0.0
    %147 = vmatpush1.msra.mxu0 %v114
    %148 = vmatprep.subr.mxu0 0.0
    %149 = vmatpush1.msra.mxu0 %v115
    %150 = vmatprep.subr.mxu0 0.0
    %151 = vmatpush1.msra.mxu0 %v144
    %152 = vmatprep.subr.mxu0 0.0
    %153 = vmatpush1.msra.mxu0 0.0
    %154 = vmatprep.subr.mxu0 0.0
    %155 = vmatpush1.msra.mxu0 0.0
    %156 = vmatprep.subr.mxu0 0.0
    %157 = vmatpush1.msra.mxu0 0.0
    %158 = vmatprep.subr.mxu0 0.0
    %159 = vmatpush1.msra.mxu0 0.0
    %160 = vmatprep.subr.mxu0 0.0
    %161 = vmatpush1.msra.mxu0 0.0
    %162 = vmatprep.subr.mxu0 0.0
    %163 = vmatpush1.msra.mxu0 0.0
    %164 = vmatprep.subr.mxu0 0.0
    %165 = vmatpush1.msra.mxu0 0.0
    %166 = vmatprep.subr.mxu0 0.0
    %167 = vmatpush1.msra.mxu0 0.0
    %168 = vmatprep.subr.mxu0 0.0
    %169 = vmatpush1.msra.mxu0 0.0
    %170 = vmatprep.subr.mxu0 0.0
    %171 = vmatpush1.msra.mxu0 0.0
    %172 = vmatprep.subr.mxu0 0.0
    %173 = vmatpush1.msra.mxu0 0.0
    %174 = vmatprep.subr.mxu0 0.0
    %175 = vmatpush1.msra.mxu0 0.0
    %176 = vmatprep.subr.mxu0 0.0
    %177 = vmatpush1.msra.mxu0 0.0
    %178 = vmatprep.subr.mxu0 0.0
    %179 = vmatpush1.msra.mxu0 0.0
    %180 = vmatprep.subr.mxu0 0.0
    %181 = vmatpush1.msra.mxu0 0.0
    %182 = vmatprep.subr.mxu0 0.0
    %183 = vmatpush1.msra.mxu0 0.0
    %184 = vmatprep.subr.mxu0 0.0
    %185 = vmatpush1.msra.mxu0 0.0
    %186 = vmatprep.subr.mxu0 0.0
    %187 = vmatpush1.msra.mxu0 0.0
    %188 = vmatprep.subr.mxu0 0.0
    %189 = vmatpush1.msra.mxu0 0.0
    %190 = vmatprep.subr.mxu0 0.0
    %191 = vmatpush1.msra.mxu0 0.0
    %192 = vmatprep.subr.mxu0 0.0
    %193 = vmatpush1.msra.mxu0 0.0
    %194 = vmatprep.subr.mxu0 0.0
    %195 = vmatpush1.msra.mxu0 0.0
    %196 = vmatprep.subr.mxu0 0.0
    %197 = vmatpush1.msra.mxu0 0.0
    %198 = vmatprep.subr.mxu0 0.0
    %199 = vmatpush1.msra.mxu0 0.0
    %200 = vmatprep.subr.mxu0 0.0
    %201 = vmatpush1.msra.mxu0 0.0
    %202 = vmatprep.subr.mxu0 0.0
    %203 = vmatpush1.msra.mxu0 0.0
    %204 = vmatprep.subr.mxu0 0.0
    %205 = vmatpush1.msra.mxu0 0.0
    %206 = vmatprep.subr.mxu0 0.0
    %207 = vmatpush1.msra.mxu0 0.0
    %208 = vmatprep.subr.mxu0 0.0
    %209 = vmatpush1.msra.mxu0 0.0
    %210 = vmatprep.mubr.f32.mxu0 0.0
    %211 = vmatmul.mubr.f32.gmra.mrb[0].mxu0 %v119
    %v212 = vpop.f32.mrb[0].mxu0
    %v213 = vadd.f32 0.0, %v212
    %v214 = vpop.f32.mrb[0].mxu0
    %215 = vmatprep.mubr.f32.mxu0 0.0
    %216 = vmatmul.mubr.f32.gmra.mrb[0].mxu0 %v122
    %v217 = vpop.f32.mrb[0].mxu0
    %v218 = vadd.f32 0.0, %v217
    %v219 = vpop.f32.mrb[0].mxu0
    %220 = vmatprep.mubr.f32.mxu0 0.0
    %221 = vmatmul.mubr.f32.gmra.mrb[0].mxu0 %v125
    %v222 = vpop.f32.mrb[0].mxu0
    %v223 = vadd.f32 0.0, %v222
    %v224 = vpop.f32.mrb[0].mxu0
    %225 = vmatprep.mubr.f32.mxu0 0.0
    %226 = vmatmul.mubr.f32.gmra.mrb[0].mxu0 %v128
    %v227 = vpop.f32.mrb[0].mxu0
    %v228 = vadd.f32 0.0, %v227
    %v229 = vpop.f32.mrb[0].mxu0
    %230 = vmatprep.mubr.f32.mxu0 0.0
    %231 = vmatmul.mubr.f32.gmra.mrb[0].mxu0 %v131
    %v232 = vpop.f32.mrb[0].mxu0
    %v233 = vadd.f32 0.0, %v232
    %v234 = vpop.f32.mrb[0].mxu0
    %235 = vmatprep.mubr.f32.mxu0 0.0
    %236 = vmatmul.mubr.f32.gmra.mrb[0].mxu0 %v134
    %v237 = vpop.f32.mrb[0].mxu0
    %v238 = vadd.f32 0.0, %v237
    %v239 = vpop.f32.mrb[0].mxu0
    %240 = vmatprep.mubr.f32.mxu0 0.0
    %241 = vmatmul.mubr.f32.gmra.mrb[0].mxu0 %v137
    %v242 = vpop.f32.mrb[0].mxu0
    %v243 = vadd.f32 0.0, %v242
    %v244 = vpop.f32.mrb[0].mxu0
    %245 = vmatprep.mubr.f32.mxu0 0.0
    %246 = vmatmul.mubr.f32.gmra.mrb[0].mxu0 %v140
    %v247 = vpop.f32.mrb[0].mxu0
    %v248 = vadd.f32 0.0, %v247
    %v249 = vpop.f32.mrb[0].mxu0
    %250 = vdwg.mxu0
    %v251 = vld [vmem:[%s4] sm:$0xff]
    %v252 = vld [vmem:[%s4 + $0x8] sm:$0xff]
    %s253 = scalar_lea.vmem %s4, 16
    %v254 = vld [vmem:[%s253] sm:$0xff]
    %v255 = vld [vmem:[%s253 + $0x8] sm:$0xff]
    %s256 = smul.f32 %s101, 4.0
    %v257 = vstv %s256
    %v258 = vrcp.pop %v257
    %s259 = vtos %v258
    %v260 = vadd.f32 %v213, %v223
    %v261 = vadd.f32 %v260, %v233
    %v262 = vadd.f32 %v261, %v243
    %v263 = vadd.f32 %v218, %v228
    %v264 = vadd.f32 %v263, %v238
    %v265 = vadd.f32 %v264, %v248
    %266 = vadd.xlane.f32.xlu0 %v262
    %v267 = vpop.xlane.xlu0 %266
    %268 = vadd.xlane.f32.xlu0 %v265
    %v269 = vpop.xlane.xlu0 %268
    %v270 = vstv %s259
    %v271 = vmul.f32 %v267, %v270
    %v272 = vmul.f32 %v269, %v270
    %v273 = vsub.f32 %v213, %v271
    %v274 = vsub.f32 %v218, %v272
    %v275 = vsub.f32 %v223, %v271
    %v276 = vsub.f32 %v228, %v272
    %v277 = vsub.f32 %v233, %v271
    %v278 = vsub.f32 %v238, %v272
    %v279 = vsub.f32 %v243, %v271
    %v280 = vsub.f32 %v248, %v272
    %v281 = vsel %vm105, 1, 0
    %vm282 = vcmp.eq.s32.totalorder %v281, 1
    %v283 = vsel %vm282, %v273, 0.0
    %v284 = vsel %vm282, %v274, 0.0
    %v285 = vsel %vm282, %v275, 0.0
    %v286 = vsel %vm282, %v276, 0.0
    %v287 = vsel %vm282, %v277, 0.0
    %v288 = vsel %vm282, %v278, 0.0
    %v289 = vsel %vm282, %v279, 0.0
    %v290 = vsel %vm282, %v280, 0.0
    %v291 = vmul.f32 %v283, %v283
    %v292 = vmul.f32 %v284, %v284
    %v293 = vmul.f32 %v285, %v285
    %v294 = vmul.f32 %v286, %v286
    %v295 = vmul.f32 %v287, %v287
    %v296 = vmul.f32 %v288, %v288
    %v297 = vmul.f32 %v289, %v289
    %v298 = vmul.f32 %v290, %v290
    %v299 = vadd.f32 %v291, %v293
    %v300 = vadd.f32 %v299, %v295
    %v301 = vadd.f32 %v300, %v297
    %v302 = vadd.f32 %v292, %v294
    %v303 = vadd.f32 %v302, %v296
    %v304 = vadd.f32 %v303, %v298
    %305 = vadd.xlane.f32.xlu0 %v301
    %v306 = vpop.xlane.xlu0 %305
    %307 = vadd.xlane.f32.xlu0 %v304
    %v308 = vpop.xlane.xlu0 %307
    %v309 = vmul.f32 %v306, %v270
    %v310 = vmul.f32 %v308, %v270
    %v311 = vadd.f32 %v309, 1e-05
    %v312 = vadd.f32 %v310, 1e-05
    %v313 = vrsqrt.pop %v311
    %v314 = vrsqrt.pop %v312
    %v315 = vmul.f32 %v251, %v313
    %v316 = vmul.f32 %v252, %v314
    %318 = vset.pattern.permute.xlu0 0
    %319 = vperm.xlu0 %318, %v315
    %v320 = vpop.permute.xlu0 %319
    %323 = vset.pattern.permute.xlu0 0
    %324 = vperm.xlu0 %323, %v316
    %v325 = vpop.permute.xlu0 %324
    %v327 = vmul.f32 %v283, %v320
    %v328 = vmul.f32 %v284, %v325
    %v329 = vmul.f32 %v285, %v320
    %v330 = vmul.f32 %v286, %v325
    %v331 = vmul.f32 %v287, %v320
    %v332 = vmul.f32 %v288, %v325
    %v333 = vmul.f32 %v289, %v320
    %v334 = vmul.f32 %v290, %v325
    %336 = vset.pattern.permute.xlu0 0
    %337 = vperm.xlu0 %336, %v254
    %v338 = vpop.permute.xlu0 %337
    %341 = vset.pattern.permute.xlu0 0
    %342 = vperm.xlu0 %341, %v255
    %v343 = vpop.permute.xlu0 %342
    %v345 = vadd.f32 %v327, %v338
    %v346 = vadd.f32 %v328, %v343
    %v347 = vadd.f32 %v329, %v338
    %v348 = vadd.f32 %v330, %v343
    %v349 = vadd.f32 %v331, %v338
    %v350 = vadd.f32 %v332, %v343
    %v351 = vadd.f32 %v333, %v338
    %v352 = vadd.f32 %v334, %v343
    %v353 = vmax.f32 %v345, 0.0
    %v354 = vmax.f32 %v346, 0.0
    %v355 = vmax.f32 %v347, 0.0
    %v356 = vmax.f32 %v348, 0.0
    %v357 = vmax.f32 %v349, 0.0
    %v358 = vmax.f32 %v350, 0.0
    %v359 = vmax.f32 %v351, 0.0
    %v360 = vmax.f32 %v352, 0.0
    %v361 = vsel %vm282, %v353, 0.0
    %v362 = vsel %vm282, %v354, 0.0
    %v363 = vsel %vm282, %v355, 0.0
    %v364 = vsel %vm282, %v356, 0.0
    %v365 = vsel %vm282, %v357, 0.0
    %v366 = vsel %vm282, %v358, 0.0
    %v367 = vsel %vm282, %v359, 0.0
    %v368 = vsel %vm282, %v360, 0.0
    %v369 = vld [vmem:[#allocation10] sm:$0xff]
    %v370 = vld [vmem:[#allocation10 + $0x8] sm:$0xff]
    %v371 = vld [vmem:[#allocation10 + $0x10] sm:$0xff]
    %v372 = vld [vmem:[#allocation10 + $0x18] sm:$0xff]
    %v373 = vld [vmem:[#allocation10 + $0x20] sm:$0xff]
    %v374 = vld [vmem:[#allocation10 + $0x28] sm:$0xff]
    %vm375 = vcmask 523264
    %v377 = vsel %vm375, %v369, 0
    %v380 = vsel %vm375, %v370, 0
    %v383 = vsel %vm375, %v371, 0
    %v386 = vsel %vm375, %v372, 0
    %v389 = vsel %vm375, %v373, 0
    %v392 = vsel %vm375, %v374, 0
    %394 = vmatprep.subr.mxu0 0.0
    %395 = vmatpush1.msra.mxu0 %v361
    %396 = vmatprep.subr.mxu0 0.0
    %397 = vmatpush1.msra.mxu0 %v362
    %398 = vmatprep.subr.mxu0 0.0
    %399 = vmatpush1.msra.mxu0 %v363
    %400 = vmatprep.subr.mxu0 0.0
    %401 = vmatpush1.msra.mxu0 %v364
    %402 = vmatprep.subr.mxu0 0.0
    %403 = vmatpush1.msra.mxu0 %v365
    %404 = vmatprep.subr.mxu0 0.0
    %405 = vmatpush1.msra.mxu0 %v366
    %406 = vmatprep.subr.mxu0 0.0
    %407 = vmatpush1.msra.mxu0 %v367
    %408 = vmatprep.subr.mxu0 0.0
    %409 = vmatpush1.msra.mxu0 %v368
    %410 = vmatprep.subr.mxu0 0.0
    %411 = vmatpush1.msra.mxu0 0.0
    %412 = vmatprep.subr.mxu0 0.0
    %413 = vmatpush1.msra.mxu0 0.0
    %414 = vmatprep.subr.mxu0 0.0
    %415 = vmatpush1.msra.mxu0 0.0
    %416 = vmatprep.subr.mxu0 0.0
    %417 = vmatpush1.msra.mxu0 0.0
    %418 = vmatprep.subr.mxu0 0.0
    %419 = vmatpush1.msra.mxu0 0.0
    %420 = vmatprep.subr.mxu0 0.0
    %421 = vmatpush1.msra.mxu0 0.0
    %422 = vmatprep.subr.mxu0 0.0
    %423 = vmatpush1.msra.mxu0 0.0
    %424 = vmatprep.subr.mxu0 0.0
    %425 = vmatpush1.msra.mxu0 0.0
    %426 = vmatprep.subr.mxu0 0.0
    %427 = vmatpush1.msra.mxu0 0.0
    %428 = vmatprep.subr.mxu0 0.0
    %429 = vmatpush1.msra.mxu0 0.0
    %430 = vmatprep.subr.mxu0 0.0
    %431 = vmatpush1.msra.mxu0 0.0
    %432 = vmatprep.subr.mxu0 0.0
    %433 = vmatpush1.msra.mxu0 0.0
    %434 = vmatprep.subr.mxu0 0.0
    %435 = vmatpush1.msra.mxu0 0.0
    %436 = vmatprep.subr.mxu0 0.0
    %437 = vmatpush1.msra.mxu0 0.0
    %438 = vmatprep.subr.mxu0 0.0
    %439 = vmatpush1.msra.mxu0 0.0
    %440 = vmatprep.subr.mxu0 0.0
    %441 = vmatpush1.msra.mxu0 0.0
    %442 = vmatprep.subr.mxu0 0.0
    %443 = vmatpush1.msra.mxu0 0.0
    %444 = vmatprep.subr.mxu0 0.0
    %445 = vmatpush1.msra.mxu0 0.0
    %446 = vmatprep.subr.mxu0 0.0
    %447 = vmatpush1.msra.mxu0 0.0
    %448 = vmatprep.subr.mxu0 0.0
    %449 = vmatpush1.msra.mxu0 0.0
    %450 = vmatprep.subr.mxu0 0.0
    %451 = vmatpush1.msra.mxu0 0.0
    %452 = vmatprep.subr.mxu0 0.0
    %453 = vmatpush1.msra.mxu0 0.0
    %454 = vmatprep.subr.mxu0 0.0
    %455 = vmatpush1.msra.mxu0 0.0
    %456 = vmatprep.subr.mxu0 0.0
    %457 = vmatpush1.msra.mxu0 0.0
    %458 = vmatprep.mubr.f32.mxu0 0.0
    %459 = vmatmul.mubr.f32.gmra.mrb[0].mxu0 %v377
    %v460 = vpop.f32.mrb[0].mxu0
    %v461 = vadd.f32 0.0, %v460
    %v462 = vpop.f32.mrb[0].mxu0
    %463 = vmatprep.mubr.f32.mxu0 0.0
    %464 = vmatmul.mubr.f32.gmra.mrb[0].mxu0 %v380
    %v465 = vpop.f32.mrb[0].mxu0
    %v466 = vadd.f32 0.0, %v465
    %v467 = vpop.f32.mrb[0].mxu0
    %468 = vmatprep.mubr.f32.mxu0 0.0
    %469 = vmatmul.mubr.f32.gmra.mrb[0].mxu0 %v383
    %v470 = vpop.f32.mrb[0].mxu0
    %v471 = vadd.f32 0.0, %v470
    %v472 = vpop.f32.mrb[0].mxu0
    %473 = vmatprep.mubr.f32.mxu0 0.0
    %474 = vmatmul.mubr.f32.gmra.mrb[0].mxu0 %v386
    %v475 = vpop.f32.mrb[0].mxu0
    %v476 = vadd.f32 0.0, %v475
    %v477 = vpop.f32.mrb[0].mxu0
    %478 = vmatprep.mubr.f32.mxu0 0.0
    %479 = vmatmul.mubr.f32.gmra.mrb[0].mxu0 %v389
    %v480 = vpop.f32.mrb[0].mxu0
    %v481 = vadd.f32 0.0, %v480
    %v482 = vpop.f32.mrb[0].mxu0
    %483 = vmatprep.mubr.f32.mxu0 0.0
    %484 = vmatmul.mubr.f32.gmra.mrb[0].mxu0 %v392
    %v485 = vpop.f32.mrb[0].mxu0
    %v486 = vadd.f32 0.0, %v485
    %v487 = vpop.f32.mrb[0].mxu0
    %488 = vdwg.mxu0
    %s489 = scalar_lea.vmem %s4, 32
    %v490 = vld [vmem:[%s489] sm:$0xff]
    %v491 = vld [vmem:[%s489 + $0x8] sm:$0xff]
    %s492 = scalar_lea.vmem %s4, 48
    %v493 = vld [vmem:[%s492] sm:$0xff]
    %v494 = vld [vmem:[%s492 + $0x8] sm:$0xff]
    %s495 = smul.f32 %s101, 3.0
    %v496 = vstv %s495
    %v497 = vrcp.pop %v496
    %s498 = vtos %v497
    %v499 = vadd.f32 %v461, %v471
    %v500 = vadd.f32 %v499, %v481
    %v501 = vadd.f32 %v466, %v476
    %v502 = vadd.f32 %v501, %v486
    %503 = vadd.xlane.f32.xlu0 %v500
    %v504 = vpop.xlane.xlu0 %503
    %505 = vadd.xlane.f32.xlu0 %v502
    %v506 = vpop.xlane.xlu0 %505
    %v507 = vstv %s498
    %v508 = vmul.f32 %v504, %v507
    %v509 = vmul.f32 %v506, %v507
    %v510 = vsub.f32 %v461, %v508
    %v511 = vsub.f32 %v466, %v509
    %v512 = vsub.f32 %v471, %v508
    %v513 = vsub.f32 %v476, %v509
    %v514 = vsub.f32 %v481, %v508
    %v515 = vsub.f32 %v486, %v509
    %v516 = vsel %vm282, %v510, 0.0
    %v517 = vsel %vm282, %v511, 0.0
    %v518 = vsel %vm282, %v512, 0.0
    %v519 = vsel %vm282, %v513, 0.0
    %v520 = vsel %vm282, %v514, 0.0
    %v521 = vsel %vm282, %v515, 0.0
    %v522 = vmul.f32 %v516, %v516
    %v523 = vmul.f32 %v517, %v517
    %v524 = vmul.f32 %v518, %v518
    %v525 = vmul.f32 %v519, %v519
    %v526 = vmul.f32 %v520, %v520
    %v527 = vmul.f32 %v521, %v521
    %v528 = vadd.f32 %v522, %v524
    %v529 = vadd.f32 %v528, %v526
    %v530 = vadd.f32 %v523, %v525
    %v531 = vadd.f32 %v530, %v527
    %532 = vadd.xlane.f32.xlu0 %v529
    %v533 = vpop.xlane.xlu0 %532
    %534 = vadd.xlane.f32.xlu0 %v531
    %v535 = vpop.xlane.xlu0 %534
    %v536 = vmul.f32 %v533, %v507
    %v537 = vmul.f32 %v535, %v507
    %v538 = vadd.f32 %v536, 1e-05
    %v539 = vadd.f32 %v537, 1e-05
    %v540 = vrsqrt.pop %v538
    %v541 = vrsqrt.pop %v539
    %v542 = vmul.f32 %v490, %v540
    %v543 = vmul.f32 %v491, %v541
    %545 = vset.pattern.permute.xlu0 0
    %546 = vperm.xlu0 %545, %v542
    %v547 = vpop.permute.xlu0 %546
    %550 = vset.pattern.permute.xlu0 0
    %551 = vperm.xlu0 %550, %v543
    %v552 = vpop.permute.xlu0 %551
    %v554 = vmul.f32 %v516, %v547
    %v555 = vmul.f32 %v517, %v552
    %v556 = vmul.f32 %v518, %v547
    %v557 = vmul.f32 %v519, %v552
    %v558 = vmul.f32 %v520, %v547
    %v559 = vmul.f32 %v521, %v552
    %561 = vset.pattern.permute.xlu0 0
    %562 = vperm.xlu0 %561, %v493
    %v563 = vpop.permute.xlu0 %562
    %566 = vset.pattern.permute.xlu0 0
    %567 = vperm.xlu0 %566, %v494
    %v568 = vpop.permute.xlu0 %567
    %v570 = vadd.f32 %v554, %v563
    %v571 = vadd.f32 %v555, %v568
    %v572 = vadd.f32 %v556, %v563
    %v573 = vadd.f32 %v557, %v568
    %v574 = vadd.f32 %v558, %v563
    %v575 = vadd.f32 %v559, %v568
    %v576 = vmax.f32 %v570, 0.0
    %v577 = vmax.f32 %v571, 0.0
    %v578 = vmax.f32 %v572, 0.0
    %v579 = vmax.f32 %v573, 0.0
    %v580 = vmax.f32 %v574, 0.0
    %v581 = vmax.f32 %v575, 0.0
    %v582 = vld [vmem:[%s3] sm:$0xff]
    %v583 = vld [vmem:[%s5] sm:$0xff]
    %585 = vset.pattern.permute.xlu0 0
    %586 = vperm.xlu0 %585, %v583
    %v587 = vpop.permute.xlu0 %586
    %vm589 = vcmask 392192
    %v591 = vsel %vm589, %v582, 0
    %593 = vmatprep.subr.mxu0 0.0
    %594 = vmatpush1.msra.mxu0 %v576
    %595 = vmatprep.subr.mxu0 0.0
    %596 = vmatpush1.msra.mxu0 %v577
    %597 = vmatprep.subr.mxu0 0.0
    %598 = vmatpush1.msra.mxu0 %v578
    %599 = vmatprep.subr.mxu0 0.0
    %600 = vmatpush1.msra.mxu0 %v579
    %601 = vmatprep.subr.mxu0 0.0
    %602 = vmatpush1.msra.mxu0 %v580
    %603 = vmatprep.subr.mxu0 0.0
    %604 = vmatpush1.msra.mxu0 %v581
    %605 = vmatprep.subr.mxu0 0.0
    %606 = vmatpush1.msra.mxu0 0.0
    %607 = vmatprep.subr.mxu0 0.0
    %608 = vmatpush1.msra.mxu0 0.0
    %609 = vmatprep.subr.mxu0 0.0
    %610 = vmatpush1.msra.mxu0 0.0
    %611 = vmatprep.subr.mxu0 0.0
    %612 = vmatpush1.msra.mxu0 0.0
    %613 = vmatprep.subr.mxu0 0.0
    %614 = vmatpush1.msra.mxu0 0.0
    %615 = vmatprep.subr.mxu0 0.0
    %616 = vmatpush1.msra.mxu0 0.0
    %617 = vmatprep.subr.mxu0 0.0
    %618 = vmatpush1.msra.mxu0 0.0
    %619 = vmatprep.subr.mxu0 0.0
    %620 = vmatpush1.msra.mxu0 0.0
    %621 = vmatprep.subr.mxu0 0.0
    %622 = vmatpush1.msra.mxu0 0.0
    %623 = vmatprep.subr.mxu0 0.0
    %624 = vmatpush1.msra.mxu0 0.0
    %625 = vmatprep.subr.mxu0 0.0
    %626 = vmatpush1.msra.mxu0 0.0
    %627 = vmatprep.subr.mxu0 0.0
    %628 = vmatpush1.msra.mxu0 0.0
    %629 = vmatprep.subr.mxu0 0.0
    %630 = vmatpush1.msra.mxu0 0.0
    %631 = vmatprep.subr.mxu0 0.0
    %632 = vmatpush1.msra.mxu0 0.0
    %633 = vmatprep.subr.mxu0 0.0
    %634 = vmatpush1.msra.mxu0 0.0
    %635 = vmatprep.subr.mxu0 0.0
    %636 = vmatpush1.msra.mxu0 0.0
    %637 = vmatprep.subr.mxu0 0.0
    %638 = vmatpush1.msra.mxu0 0.0
    %639 = vmatprep.subr.mxu0 0.0
    %640 = vmatpush1.msra.mxu0 0.0
    %641 = vmatprep.subr.mxu0 0.0
    %642 = vmatpush1.msra.mxu0 0.0
    %643 = vmatprep.subr.mxu0 0.0
    %644 = vmatpush1.msra.mxu0 0.0
    %645 = vmatprep.subr.mxu0 0.0
    %646 = vmatpush1.msra.mxu0 0.0
    %647 = vmatprep.subr.mxu0 0.0
    %648 = vmatpush1.msra.mxu0 0.0
    %649 = vmatprep.subr.mxu0 0.0
    %650 = vmatpush1.msra.mxu0 0.0
    %651 = vmatprep.subr.mxu0 0.0
    %652 = vmatpush1.msra.mxu0 0.0
    %653 = vmatprep.subr.mxu0 0.0
    %654 = vmatpush1.msra.mxu0 0.0
    %655 = vmatprep.subr.mxu0 0.0
    %656 = vmatpush1.msra.mxu0 0.0
    %657 = vmatprep.mubr.f32.mxu0 0.0
    %658 = vmatmul.mubr.f32.gmra.mrb[0].mxu0 %v591
    %v659 = vpop.f32.mrb[0].mxu0
    %v660 = vadd.f32 %v587, %v659
    %v661 = vpop.f32.mrb[0].mxu0
    %662 = vdwg.mxu0
    %663 = vst [vmem:[%s8] sm:$0xff] %v660
    // Predicated region
    $region38: #{forward.2} parent=1 // pred_check
      _
    $region39: #{forward.2} parent=1 // pred_check_branch
      %665 = sbr.rel (0) target = $region41
    $region40: #{forward.2} parent=1 // pred_region
      _
    $region41: #{forward.2} parent=1 // pred_fallthru
      _
    // Predicated region
    $region42: #{forward.2} parent=1 // pred_check
      _
    $region43: #{forward.2} parent=1 // pred_check_branch
      %667 = sbr.rel (0) target = $region45
    $region44: #{forward.2} parent=1 // pred_region
      _
    $region45: #{forward.2} parent=1 // pred_fallthru
      _
    %668 = vsyncpa [#allocation9], 1
    %669 = vsyncpa [#allocation11], 1

</llo_original>
